<compile_context>
chip_gen: v5e
topology: v5e:2x2
jax: 0.10.0
libtpu: 0.0.40
codegen_flags: <defaults>
</compile_context>

<pallas_src>
import jax
import jax.numpy as jnp
from jax.experimental import pallas as pl
from jax.experimental.pallas import tpu as pltpu

EPS = 1e-5


def _make_kernel(N, H, pairs, img_rows, WC):
    """Builds the kernel closure over the static layout parameters."""
    L = 2 * WC           # packed lane width (= 128 for W=16, C=4)
    rpi_p = 2 * pairs    # padded rows per image in the element-row slab

    def kernel(xa_ref, w1_ref, w2_ref, gmean_ref,
               g1_ref, be1_ref, g2_ref, be2_ref, out_ref):
        Rp = xa_ref.shape[0]     # packed slab rows (2 global pads each end + images + align pad)
        Rb = Rp - 2              # rows after conv1
        Rc = Rp - 4              # rows after conv2 (= kernel output rows)

        def conv(a, w_ref):
            # One MXU matmul per conv: K = 128, N = 384 (three packed-row
            # column blocks: prev / curr / next).  The vertical shifts are
            # overlapping static row slices of q (no roll / concat / scratch).
            n = a.shape[0] - 2
            q = jnp.dot(a, w_ref[...], preferred_element_type=jnp.float32)
            return (q[0:n, 0:L]
                    + q[1:n + 1, L:2 * L]
                    + q[2:n + 2, 2 * L:3 * L])

        def bn(ym, g, b):
            # Single-pass training-mode batch norm on masked activations.
            # sum and sum-of-squares are folded across the 2*W lane groups of
            # each channel with ONE (2,L)x(L,L) matmul against gmean
            # (which also divides by N*H*W).
            s = jnp.sum(ym, axis=0, keepdims=True)                   # (1, L)
            ss = jnp.sum(ym * ym, axis=0, keepdims=True)             # (1, L)
            stats = jnp.concatenate([s, ss], axis=0)                 # (2, L)
            folded = jnp.dot(stats, gmean_ref[...],
                             preferred_element_type=jnp.float32)     # (2, L)
            mean, ex2 = folded[0:1], folded[1:2]
            inv = jax.lax.rsqrt(ex2 - mean * mean + EPS)
            return (ym - mean) * (inv * g) + b

        # ---- in-kernel row-validity mask (no HBM mask stream) -------------
        # Packed slab row p holds image element rows 2p and 2p+1; lanes
        # [0, WC) are the even element row, [WC, 2*WC) the odd one.  A lane
        # is "real" iff its element row is a non-pad row of some image.
        row = jax.lax.broadcasted_iota(jnp.int32, (Rb, L), 0) + 1    # slab rows 1..Rp-2
        lane = jax.lax.broadcasted_iota(jnp.int32, (Rb, L), 1)
        half1 = lane >= WC
        m = (row >= 2) & (row < 2 + img_rows)                        # inside image region
        pad_elems = [0] + list(range(H + 1, rpi_p))                  # per-image pad rows
        for i in range(N):
            base = 2 + i * pairs
            for e in pad_elems:
                p = base + e // 2
                if e % 2 == 0:
                    m = m & jnp.logical_not((row == p) & jnp.logical_not(half1))
                else:
                    m = m & jnp.logical_not((row == p) & half1)
        mask_h = m.astype(jnp.float32)                               # rows of h (slab 1..Rp-2)
        mask_y = mask_h[1:1 + Rc]                                    # rows of y (slab 2..Rp-3)

        xa = xa_ref[...]                                             # (Rp, L)

        # conv1 -> bn1 -> relu   (h row i corresponds to slab packed row i+1)
        h = conv(xa, w1_ref) * mask_h
        h = jnp.maximum(bn(h, g1_ref[...], be1_ref[...]), 0.0) * mask_h

        # conv2 -> bn2           (y row j corresponds to slab packed row j+2)
        y = conv(h, w2_ref) * mask_y
        y = bn(y, g2_ref[...], be2_ref[...])

        # residual add: the matching packed rows of the input slab ARE x_in
        out_ref[...] = y + xa[2:2 + Rc]

    return kernel


def _fold_conv_weight_packed(w, width, c):
    """PyTorch (Cout, Cin, 3, 3) conv weight -> packed banded (2*W*C, 3*2*W*C).

    Lane layout: a packed row is [element row 2p | element row 2p+1], each
    half being a W*C lane-folded image row.  Column block k in {prev, curr,
    next} is applied to packed input row o-1 / o / o+1 when producing packed
    output row o."""
    wt = jnp.transpose(w, (2, 3, 1, 0)).astype(jnp.float32)   # (ky, kx, Cin, Cout)

    def band(ky):
        m = jnp.zeros((width * c, width * c), jnp.float32)
        for kx in range(3):
            sel = jnp.eye(width, k=-(kx - 1), dtype=jnp.float32)   # sel[x_in, x_out]
            m = m + jnp.kron(sel, wt[ky, kx])
        return m

    B0, B1, B2 = band(0), band(1), band(2)
    Z = jnp.zeros_like(B0)
    prev = jnp.block([[Z, Z], [B0, Z]])      # in[2o-1] -> out[2o]   (kernel row 0)
    curr = jnp.block([[B1, B0], [B2, B1]])   # in[2o],in[2o+1] -> out[2o],out[2o+1]
    nxt = jnp.block([[Z, B2], [Z, Z]])       # in[2o+2] -> out[2o+1] (kernel row 2)
    return jnp.concatenate([prev, curr, nxt], axis=1)          # (2WC, 6WC)


@jax.jit
def residual_block(x_nchw, w1, b1, g1, be1, w2, b2, g2, be2):
    # NOTE: conv biases b1/b2 cancel exactly under training-mode batch norm
    # (the batch mean absorbs any per-channel constant), so they never reach
    # the kernel.
    N, C, H, W = x_nchw.shape
    WC = W * C
    L = 2 * WC                                  # packed lane width (128 here)

    rpi = H + 2                                 # per-image rows incl. 1 pad each end
    extra = rpi % 2                             # pad to an even row count per image
    rpi_p = rpi + extra
    pairs = rpi_p // 2                          # packed rows per image
    img_rows = N * pairs
    out_rows = -(-img_rows // 8) * 8            # multiple of 8 -> aligned, unmasked stores
    Rp = out_rows + 4                           # + 2 global pad packed rows each end

    x = jnp.transpose(x_nchw, (0, 2, 3, 1)).astype(jnp.float32)          # NHWC
    xp = jnp.pad(x, ((0, 0), (1, 1 + extra), (0, 0), (0, 0)))            # (N, rpi_p, W, C)
    packed = xp.reshape(img_rows, L)                                     # 2 rows / lane row
    xa = jnp.pad(packed, ((2, Rp - 2 - img_rows), (0, 0)))               # (Rp, L)

    w1f = _fold_conv_weight_packed(w1, W, C)
    w2f = _fold_conv_weight_packed(w2, W, C)
    # folds the 2*W lane groups of a channel together and averages over N*H*W
    gmean = (jnp.kron(jnp.ones((2 * W, 2 * W), jnp.float32),
                      jnp.eye(C, dtype=jnp.float32)) / float(N * H * W))
    fold = lambda v: jnp.tile(v.astype(jnp.float32), 2 * W).reshape(1, L)

    kernel = _make_kernel(N, H, pairs, img_rows, WC)

    vmem = pl.BlockSpec(memory_space=pltpu.MemorySpace.VMEM)
    out = pl.pallas_call(
        kernel,
        out_shape=jax.ShapeDtypeStruct((Rp - 4, L), jnp.float32),
        in_specs=[vmem] * 8,
        out_specs=vmem,
        compiler_params=pltpu.CompilerParams(vmem_limit_bytes=32 * 1024 * 1024),
    )(xa, w1f, w2f, gmean, fold(g1), fold(be1), fold(g2), fold(be2))

    # output packed row j (j < img_rows) holds image element rows 2j, 2j+1;
    # the wrapper's [:, 1:H+1] slice drops the per-image pad rows (their
    # contents are BN-shifted garbage by design).
    y = out[:img_rows].reshape(N, rpi_p, W, C)[:, 1:H + 1]
    return jnp.transpose(y, (0, 3, 1, 2))                                # NCHW


def reference_forward(x, w1, b1, g1, be1, w2, b2, g2, be2):
    def conv(x, w, b):
        y = jax.lax.conv_general_dilated(
            x, w, window_strides=(1, 1), padding=[(1, 1), (1, 1)],
            dimension_numbers=("NCHW", "OIHW", "NCHW"))
        return y + b[None, :, None, None]

    def bn(x, g, bt):
        mean = jnp.mean(x, axis=(0, 2, 3), keepdims=True)
        var = jnp.mean((x - mean) ** 2, axis=(0, 2, 3), keepdims=True)
        return ((x - mean) * jax.lax.rsqrt(var + EPS)
                * g[None, :, None, None] + bt[None, :, None, None])

    h = jax.nn.relu(bn(conv(x, w1, b1), g1, be1))
    return bn(conv(h, w2, b2), g2, be2) + x


if __name__ == "__main__":
    N, C, H, W = 2, 4, 16, 16
    key = jax.random.PRNGKey(0)
    ks = jax.random.split(key, 9)

    x = jax.random.normal(ks[0], (N, C, H, W), jnp.float32)
    scale = 1.0 / jnp.sqrt(C * 9.0)
    w1 = jax.random.normal(ks[1], (C, C, 3, 3), jnp.float32) * scale
    b1 = jax.random.normal(ks[2], (C,), jnp.float32) * 0.1
    w2 = jax.random.normal(ks[3], (C, C, 3, 3), jnp.float32) * scale
    b2 = jax.random.normal(ks[4], (C,), jnp.float32) * 0.1
    g1 = 1.0 + 0.1 * jax.random.normal(ks[5], (C,), jnp.float32)
    be1 = 0.1 * jax.random.normal(ks[6], (C,), jnp.float32)
    g2 = 1.0 + 0.1 * jax.random.normal(ks[7], (C,), jnp.float32)
    be2 = 0.1 * jax.random.normal(ks[8], (C,), jnp.float32)

    out = jax.block_until_ready(
        residual_block(x, w1, b1, g1, be1, w2, b2, g2, be2))
    ref = reference_forward(x, w1, b1, g1, be1, w2, b2, g2, be2)

    assert out.shape == (N, C, H, W)
    assert jnp.allclose(out, ref, rtol=1e-4, atol=1e-4), (
        f"max err {jnp.max(jnp.abs(out - ref))}")

    print("KERNEL_OK")
</pallas_src>

<mosaic_0001>
module attributes {stable_mosaic.version = 11 : i64} {
  func.func @kernel(%arg0: memref<28x128xf32, #tpu.memory_space<vmem>>, %arg1: memref<128x384xf32, #tpu.memory_space<vmem>>, %arg2: memref<128x384xf32, #tpu.memory_space<vmem>>, %arg3: memref<128x128xf32, #tpu.memory_space<vmem>>, %arg4: memref<1x128xf32, #tpu.memory_space<vmem>>, %arg5: memref<1x128xf32, #tpu.memory_space<vmem>>, %arg6: memref<1x128xf32, #tpu.memory_space<vmem>>, %arg7: memref<1x128xf32, #tpu.memory_space<vmem>>, %arg8: memref<24x128xf32, #tpu.memory_space<vmem>>) attributes {dimension_semantics = [], scalar_prefetch = 0 : i64, scratch_operands = 0 : i64, tpu.core_type = #tpu.core_type<tc>} {
    %0 = tpu.iota {dimensions = array<i32: 0>} : vector<26x128xi32>
    %c1_i32 = arith.constant 1 : i32
    %1 = vector.broadcast %c1_i32 : i32 to vector<26x128xi32>
    %2 = arith.addi %0, %1 : vector<26x128xi32>
    %3 = tpu.iota {dimensions = array<i32: 1>} : vector<26x128xi32>
    %c64_i32 = arith.constant 64 : i32
    %4 = vector.broadcast %c64_i32 : i32 to vector<26x128xi32>
    %5 = arith.cmpi sge, %3, %4 : vector<26x128xi32>
    %c2_i32 = arith.constant 2 : i32
    %6 = vector.broadcast %c2_i32 : i32 to vector<26x128xi32>
    %7 = arith.cmpi sge, %2, %6 : vector<26x128xi32>
    %c20_i32 = arith.constant 20 : i32
    %8 = vector.broadcast %c20_i32 : i32 to vector<26x128xi32>
    %9 = arith.cmpi slt, %2, %8 : vector<26x128xi32>
    %10 = arith.andi %7, %9 : vector<26x128xi1>
    %c2_i32_0 = arith.constant 2 : i32
    %11 = vector.broadcast %c2_i32_0 : i32 to vector<26x128xi32>
    %12 = arith.cmpi eq, %2, %11 : vector<26x128xi32>
    %cst = arith.constant dense<true> : vector<26x128xi1>
    %13 = arith.xori %5, %cst : vector<26x128xi1>
    %14 = arith.andi %12, %13 : vector<26x128xi1>
    %cst_1 = arith.constant dense<true> : vector<26x128xi1>
    %15 = arith.xori %14, %cst_1 : vector<26x128xi1>
    %16 = arith.andi %10, %15 : vector<26x128xi1>
    %c10_i32 = arith.constant 10 : i32
    %17 = vector.broadcast %c10_i32 : i32 to vector<26x128xi32>
    %18 = arith.cmpi eq, %2, %17 : vector<26x128xi32>
    %19 = arith.andi %18, %5 : vector<26x128xi1>
    %cst_2 = arith.constant dense<true> : vector<26x128xi1>
    %20 = arith.xori %19, %cst_2 : vector<26x128xi1>
    %21 = arith.andi %16, %20 : vector<26x128xi1>
    %c11_i32 = arith.constant 11 : i32
    %22 = vector.broadcast %c11_i32 : i32 to vector<26x128xi32>
    %23 = arith.cmpi eq, %2, %22 : vector<26x128xi32>
    %cst_3 = arith.constant dense<true> : vector<26x128xi1>
    %24 = arith.xori %5, %cst_3 : vector<26x128xi1>
    %25 = arith.andi %23, %24 : vector<26x128xi1>
    %cst_4 = arith.constant dense<true> : vector<26x128xi1>
    %26 = arith.xori %25, %cst_4 : vector<26x128xi1>
    %27 = arith.andi %21, %26 : vector<26x128xi1>
    %c19_i32 = arith.constant 19 : i32
    %28 = vector.broadcast %c19_i32 : i32 to vector<26x128xi32>
    %29 = arith.cmpi eq, %2, %28 : vector<26x128xi32>
    %30 = arith.andi %29, %5 : vector<26x128xi1>
    %cst_5 = arith.constant dense<true> : vector<26x128xi1>
    %31 = arith.xori %30, %cst_5 : vector<26x128xi1>
    %32 = arith.andi %27, %31 : vector<26x128xi1>
    %33 = arith.extui %32 : vector<26x128xi1> to vector<26x128xi32>
    %34 = arith.sitofp %33 : vector<26x128xi32> to vector<26x128xf32>
    %35 = vector.extract_strided_slice %34 {offsets = [1, 0], sizes = [24, 128], strides = [1, 1]} : vector<26x128xf32> to vector<24x128xf32>
    %c0 = arith.constant 0 : index
    %c0_6 = arith.constant 0 : index
    %36 = vector.load %arg0[%c0, %c0_6] : memref<28x128xf32, #tpu.memory_space<vmem>>, vector<28x128xf32>
    %c0_7 = arith.constant 0 : index
    %c0_8 = arith.constant 0 : index
    %37 = vector.load %arg1[%c0_7, %c0_8] : memref<128x384xf32, #tpu.memory_space<vmem>>, vector<128x384xf32>
    %cst_9 = arith.constant dense<0.000000e+00> : vector<28x384xf32>
    %38 = tpu.matmul %36, %37, %cst_9 {dimension_numbers = #tpu.dot_dimension_numbers<[1], [0], [0], [1], [0, 0, 1, 1], [], []>} : vector<28x128xf32>, vector<128x384xf32>, vector<28x384xf32> -> vector<28x384xf32>
    %39 = vector.extract_strided_slice %38 {offsets = [0, 0], sizes = [26, 128], strides = [1, 1]} : vector<28x384xf32> to vector<26x128xf32>
    %40 = vector.extract_strided_slice %38 {offsets = [1, 128], sizes = [26, 128], strides = [1, 1]} : vector<28x384xf32> to vector<26x128xf32>
    %41 = arith.addf %39, %40 : vector<26x128xf32>
    %42 = vector.extract_strided_slice %38 {offsets = [2, 256], sizes = [26, 128], strides = [1, 1]} : vector<28x384xf32> to vector<26x128xf32>
    %43 = arith.addf %41, %42 : vector<26x128xf32>
    %44 = arith.mulf %43, %34 : vector<26x128xf32>
    %c0_10 = arith.constant 0 : index
    %c0_11 = arith.constant 0 : index
    %45 = vector.load %arg4[%c0_10, %c0_11] : memref<1x128xf32, #tpu.memory_space<vmem>>, vector<1x128xf32>
    %c0_12 = arith.constant 0 : index
    %c0_13 = arith.constant 0 : index
    %46 = vector.load %arg5[%c0_12, %c0_13] : memref<1x128xf32, #tpu.memory_space<vmem>>, vector<1x128xf32>
    %cst_14 = arith.constant dense<0.000000e+00> : vector<128xf32>
    %47 = vector.multi_reduction <add>, %44, %cst_14 [0] : vector<26x128xf32> to vector<128xf32>
    %48 = vector.shape_cast %47 : vector<128xf32> to vector<1x128xf32>
    %49 = arith.mulf %44, %44 : vector<26x128xf32>
    %cst_15 = arith.constant dense<0.000000e+00> : vector<128xf32>
    %50 = vector.multi_reduction <add>, %49, %cst_15 [0] : vector<26x128xf32> to vector<128xf32>
    %51 = vector.shape_cast %50 : vector<128xf32> to vector<1x128xf32>
    %52 = tpu.concatenate %48, %51 in 0 : vector<1x128xf32>, vector<1x128xf32> -> vector<2x128xf32>
    %c0_16 = arith.constant 0 : index
    %c0_17 = arith.constant 0 : index
    %53 = vector.load %arg3[%c0_16, %c0_17] : memref<128x128xf32, #tpu.memory_space<vmem>>, vector<128x128xf32>
    %cst_18 = arith.constant dense<0.000000e+00> : vector<2x128xf32>
    %54 = tpu.matmul %52, %53, %cst_18 {dimension_numbers = #tpu.dot_dimension_numbers<[1], [0], [0], [1], [0, 0, 1, 1], [], []>} : vector<2x128xf32>, vector<128x128xf32>, vector<2x128xf32> -> vector<2x128xf32>
    %55 = vector.extract_strided_slice %54 {offsets = [0, 0], sizes = [1, 128], strides = [1, 1]} : vector<2x128xf32> to vector<1x128xf32>
    %56 = vector.extract_strided_slice %54 {offsets = [1, 0], sizes = [1, 128], strides = [1, 1]} : vector<2x128xf32> to vector<1x128xf32>
    %57 = arith.mulf %55, %55 : vector<1x128xf32>
    %58 = arith.subf %56, %57 : vector<1x128xf32>
    %cst_19 = arith.constant 9.99999974E-6 : f32
    %59 = vector.broadcast %cst_19 : f32 to vector<1x128xf32>
    %60 = arith.addf %58, %59 : vector<1x128xf32>
    %61 = math.rsqrt %60 : vector<1x128xf32>
    %62 = vector.broadcast %55 : vector<1x128xf32> to vector<26x128xf32>
    %63 = arith.subf %44, %62 : vector<26x128xf32>
    %64 = arith.mulf %61, %45 : vector<1x128xf32>
    %65 = vector.broadcast %64 : vector<1x128xf32> to vector<26x128xf32>
    %66 = arith.mulf %63, %65 : vector<26x128xf32>
    %67 = vector.broadcast %46 : vector<1x128xf32> to vector<26x128xf32>
    %68 = arith.addf %66, %67 : vector<26x128xf32>
    %cst_20 = arith.constant 0.000000e+00 : f32
    %69 = vector.broadcast %cst_20 : f32 to vector<26x128xf32>
    %70 = arith.maximumf %68, %69 : vector<26x128xf32>
    %71 = arith.mulf %70, %34 : vector<26x128xf32>
    %c0_21 = arith.constant 0 : index
    %c0_22 = arith.constant 0 : index
    %72 = vector.load %arg2[%c0_21, %c0_22] : memref<128x384xf32, #tpu.memory_space<vmem>>, vector<128x384xf32>
    %cst_23 = arith.constant dense<0.000000e+00> : vector<26x384xf32>
    %73 = tpu.matmul %71, %72, %cst_23 {dimension_numbers = #tpu.dot_dimension_numbers<[1], [0], [0], [1], [0, 0, 1, 1], [], []>} : vector<26x128xf32>, vector<128x384xf32>, vector<26x384xf32> -> vector<26x384xf32>
    %74 = vector.extract_strided_slice %73 {offsets = [0, 0], sizes = [24, 128], strides = [1, 1]} : vector<26x384xf32> to vector<24x128xf32>
    %75 = vector.extract_strided_slice %73 {offsets = [1, 128], sizes = [24, 128], strides = [1, 1]} : vector<26x384xf32> to vector<24x128xf32>
    %76 = arith.addf %74, %75 : vector<24x128xf32>
    %77 = vector.extract_strided_slice %73 {offsets = [2, 256], sizes = [24, 128], strides = [1, 1]} : vector<26x384xf32> to vector<24x128xf32>
    %78 = arith.addf %76, %77 : vector<24x128xf32>
    %79 = arith.mulf %78, %35 : vector<24x128xf32>
    %c0_24 = arith.constant 0 : index
    %c0_25 = arith.constant 0 : index
    %80 = vector.load %arg6[%c0_24, %c0_25] : memref<1x128xf32, #tpu.memory_space<vmem>>, vector<1x128xf32>
    %c0_26 = arith.constant 0 : index
    %c0_27 = arith.constant 0 : index
    %81 = vector.load %arg7[%c0_26, %c0_27] : memref<1x128xf32, #tpu.memory_space<vmem>>, vector<1x128xf32>
    %cst_28 = arith.constant dense<0.000000e+00> : vector<128xf32>
    %82 = vector.multi_reduction <add>, %79, %cst_28 [0] : vector<24x128xf32> to vector<128xf32>
    %83 = vector.shape_cast %82 : vector<128xf32> to vector<1x128xf32>
    %84 = arith.mulf %79, %79 : vector<24x128xf32>
    %cst_29 = arith.constant dense<0.000000e+00> : vector<128xf32>
    %85 = vector.multi_reduction <add>, %84, %cst_29 [0] : vector<24x128xf32> to vector<128xf32>
    %86 = vector.shape_cast %85 : vector<128xf32> to vector<1x128xf32>
    %87 = tpu.concatenate %83, %86 in 0 : vector<1x128xf32>, vector<1x128xf32> -> vector<2x128xf32>
    %c0_30 = arith.constant 0 : index
    %c0_31 = arith.constant 0 : index
    %88 = vector.load %arg3[%c0_30, %c0_31] : memref<128x128xf32, #tpu.memory_space<vmem>>, vector<128x128xf32>
    %cst_32 = arith.constant dense<0.000000e+00> : vector<2x128xf32>
    %89 = tpu.matmul %87, %88, %cst_32 {dimension_numbers = #tpu.dot_dimension_numbers<[1], [0], [0], [1], [0, 0, 1, 1], [], []>} : vector<2x128xf32>, vector<128x128xf32>, vector<2x128xf32> -> vector<2x128xf32>
    %90 = vector.extract_strided_slice %89 {offsets = [0, 0], sizes = [1, 128], strides = [1, 1]} : vector<2x128xf32> to vector<1x128xf32>
    %91 = vector.extract_strided_slice %89 {offsets = [1, 0], sizes = [1, 128], strides = [1, 1]} : vector<2x128xf32> to vector<1x128xf32>
    %92 = arith.mulf %90, %90 : vector<1x128xf32>
    %93 = arith.subf %91, %92 : vector<1x128xf32>
    %cst_33 = arith.constant 9.99999974E-6 : f32
    %94 = vector.broadcast %cst_33 : f32 to vector<1x128xf32>
    %95 = arith.addf %93, %94 : vector<1x128xf32>
    %96 = math.rsqrt %95 : vector<1x128xf32>
    %97 = vector.broadcast %90 : vector<1x128xf32> to vector<24x128xf32>
    %98 = arith.subf %79, %97 : vector<24x128xf32>
    %99 = arith.mulf %96, %80 : vector<1x128xf32>
    %100 = vector.broadcast %99 : vector<1x128xf32> to vector<24x128xf32>
    %101 = arith.mulf %98, %100 : vector<24x128xf32>
    %102 = vector.broadcast %81 : vector<1x128xf32> to vector<24x128xf32>
    %103 = arith.addf %101, %102 : vector<24x128xf32>
    %104 = vector.extract_strided_slice %36 {offsets = [2, 0], sizes = [24, 128], strides = [1, 1]} : vector<28x128xf32> to vector<24x128xf32>
    %105 = arith.addf %103, %104 : vector<24x128xf32>
    %c0_34 = arith.constant 0 : index
    %c0_35 = arith.constant 0 : index
    %106 = vector.load %arg8[%c0_34, %c0_35] : memref<24x128xf32, #tpu.memory_space<vmem>>, vector<24x128xf32>
    tpu.vector_store %arg8[%c0_34, %c0_35], %105 {strides = array<i32>} : memref<24x128xf32, #tpu.memory_space<vmem>>, vector<24x128xf32>,
    return
  }
}

</mosaic_0001>

<llo_original>
// kernel: tile.23
$region0: #{tile.23}
  #allocation0 [shape = 's32[1]{0}', space=sflag, size = 0x4, scoped, tag = 'scoped memory for tile.23']
  %s0 = inlined_call_operand.vmem [shape: f32[4], index: 0, kind: input, shape index: {}]
  %s1 = inlined_call_operand.vmem [shape: f32[32,4], index: 1, kind: output, shape index: {}]
  // Predicated region
  $region2: #{tile.23} parent=0 // pred_check
    _
  $region3: #{tile.23} parent=0 // pred_check_branch
    %3 = sbr.rel (0) target = $region5
  $region4: #{tile.23} parent=0 // pred_region
    _
  $region5: #{tile.23} parent=0 // pred_fallthru
    _
  %v4 = vld [vmem:[%s0] ss:$0 sm:$0xff]
  %5 = vst [vmem:[%s1] sm:$0xff] %v4
  %s6 = scalar_lea.vmem %s1, 8
  %7 = vst [vmem:[%s6] sm:$0xff] %v4
  %s8 = scalar_lea.vmem %s1, 16
  %9 = vst [vmem:[%s8] sm:$0xff] %v4
  %s10 = scalar_lea.vmem %s1, 24
  %11 = vst [vmem:[%s10] sm:$0xff] %v4

// kernel: tile.24
$region0: #{tile.24}
  %s0 = inlined_call_operand.vmem [shape: f32[32,4], index: 0, kind: input, shape index: {}]
  %s1 = inlined_call_operand.vmem [shape: f32[1,128], index: 1, kind: output, shape index: {}]
  $region1: #{tile.24} parent=0
    #allocation0 [shape = 'u8[4096]{0}', space=vmem, size = 0x1000, scoped, tag = 'scoped mem for output reshape']
    %v2 = vld [vmem:[%s0] sm:$0x1]
    %vm3 = vcmask 31744
    %4 = vst.msk [vmem:[#allocation0] sm:$0x1] %vm3, %v2
    %s5 = scalar_lea.vmem %s0, 31
    %v6 = vld [vmem:[%s5] sm:$0x1]
    %7 = vrot.lane.b32.xlu0 %v6, 124
    %v8 = vpop.permute.xlu0 %7
    %vm9 = vcmask 1048544
    %10 = vst.msk [vmem:[#allocation0] sm:$0x1] %vm9, %v8
    %s11 = scalar_lea.vmem %s0, 30
    %v12 = vld [vmem:[%s11] sm:$0x1]
    %13 = vrot.lane.b32.xlu0 %v12, 120
    %v14 = vpop.permute.xlu0 %13
    %vm15 = vcmask 1015744
    %16 = vst.msk [vmem:[#allocation0] sm:$0x1] %vm15, %v14
    %s17 = scalar_lea.vmem %s0, 29
    %v18 = vld [vmem:[%s17] sm:$0x1]
    %19 = vrot.lane.b32.xlu0 %v18, 116
    %v20 = vpop.permute.xlu0 %19
    %vm21 = vcmask 982944
    %22 = vst.msk [vmem:[#allocation0] sm:$0x1] %vm21, %v20
    %s23 = scalar_lea.vmem %s0, 28
    %v24 = vld [vmem:[%s23] sm:$0x1]
    %25 = vrot.lane.b32.xlu0 %v24, 112
    %v26 = vpop.permute.xlu0 %25
    %vm27 = vcmask 950144
    %28 = vst.msk [vmem:[#allocation0] sm:$0x1] %vm27, %v26
    %s29 = scalar_lea.vmem %s0, 27
    %v30 = vld [vmem:[%s29] sm:$0x1]
    %31 = vrot.lane.b32.xlu0 %v30, 108
    %v32 = vpop.permute.xlu0 %31
    %vm33 = vcmask 917344
    %34 = vst.msk [vmem:[#allocation0] sm:$0x1] %vm33, %v32
    %s35 = scalar_lea.vmem %s0, 26
    %v36 = vld [vmem:[%s35] sm:$0x1]
    %37 = vrot.lane.b32.xlu0 %v36, 104
    %v38 = vpop.permute.xlu0 %37
    %vm39 = vcmask 884544
    %40 = vst.msk [vmem:[#allocation0] sm:$0x1] %vm39, %v38
    %s41 = scalar_lea.vmem %s0, 25
    %v42 = vld [vmem:[%s41] sm:$0x1]
    %43 = vrot.lane.b32.xlu0 %v42, 100
    %v44 = vpop.permute.xlu0 %43
    %vm45 = vcmask 851744
    %46 = vst.msk [vmem:[#allocation0] sm:$0x1] %vm45, %v44
    %s47 = scalar_lea.vmem %s0, 24
    %v48 = vld [vmem:[%s47] sm:$0x1]
    %49 = vrot.lane.b32.xlu0 %v48, 96
    %v50 = vpop.permute.xlu0 %49
    %vm51 = vcmask 818944
    %52 = vst.msk [vmem:[#allocation0] sm:$0x1] %vm51, %v50
    %s53 = scalar_lea.vmem %s0, 23
    %v54 = vld [vmem:[%s53] sm:$0x1]
    %55 = vrot.lane.b32.xlu0 %v54, 92
    %v56 = vpop.permute.xlu0 %55
    %vm57 = vcmask 786144
    %58 = vst.msk [vmem:[#allocation0] sm:$0x1] %vm57, %v56
    %s59 = scalar_lea.vmem %s0, 22
    %v60 = vld [vmem:[%s59] sm:$0x1]
    %61 = vrot.lane.b32.xlu0 %v60, 88
    %v62 = vpop.permute.xlu0 %61
    %vm63 = vcmask 753344
    %64 = vst.msk [vmem:[#allocation0] sm:$0x1] %vm63, %v62
    %s65 = scalar_lea.vmem %s0, 21
    %v66 = vld [vmem:[%s65] sm:$0x1]
    %67 = vrot.lane.b32.xlu0 %v66, 84
    %v68 = vpop.permute.xlu0 %67
    %vm69 = vcmask 720544
    %70 = vst.msk [vmem:[#allocation0] sm:$0x1] %vm69, %v68
    %s71 = scalar_lea.vmem %s0, 20
    %v72 = vld [vmem:[%s71] sm:$0x1]
    %73 = vrot.lane.b32.xlu0 %v72, 80
    %v74 = vpop.permute.xlu0 %73
    %vm75 = vcmask 687744
    %76 = vst.msk [vmem:[#allocation0] sm:$0x1] %vm75, %v74
    %s77 = scalar_lea.vmem %s0, 19
    %v78 = vld [vmem:[%s77] sm:$0x1]
    %79 = vrot.lane.b32.xlu0 %v78, 76
    %v80 = vpop.permute.xlu0 %79
    %vm81 = vcmask 654944
    %82 = vst.msk [vmem:[#allocation0] sm:$0x1] %vm81, %v80
    %s83 = scalar_lea.vmem %s0, 18
    %v84 = vld [vmem:[%s83] sm:$0x1]
    %85 = vrot.lane.b32.xlu0 %v84, 72
    %v86 = vpop.permute.xlu0 %85
    %vm87 = vcmask 622144
    %88 = vst.msk [vmem:[#allocation0] sm:$0x1] %vm87, %v86
    %s89 = scalar_lea.vmem %s0, 17
    %v90 = vld [vmem:[%s89] sm:$0x1]
    %91 = vrot.lane.b32.xlu0 %v90, 68
    %v92 = vpop.permute.xlu0 %91
    %vm93 = vcmask 589344
    %94 = vst.msk [vmem:[#allocation0] sm:$0x1] %vm93, %v92
    %s95 = scalar_lea.vmem %s0, 16
    %v96 = vld [vmem:[%s95] sm:$0x1]
    %97 = vrot.lane.b32.xlu0 %v96, 64
    %v98 = vpop.permute.xlu0 %97
    %vm99 = vcmask 556544
    %100 = vst.msk [vmem:[#allocation0] sm:$0x1] %vm99, %v98
    %s101 = scalar_lea.vmem %s0, 15
    %v102 = vld [vmem:[%s101] sm:$0x1]
    %103 = vrot.lane.b32.xlu0 %v102, 60
    %v104 = vpop.permute.xlu0 %103
    %vm105 = vcmask 523744
    %106 = vst.msk [vmem:[#allocation0] sm:$0x1] %vm105, %v104
    %s107 = scalar_lea.vmem %s0, 14
    %v108 = vld [vmem:[%s107] sm:$0x1]
    %109 = vrot.lane.b32.xlu0 %v108, 56
    %v110 = vpop.permute.xlu0 %109
    %vm111 = vcmask 490944
    %112 = vst.msk [vmem:[#allocation0] sm:$0x1] %vm111, %v110
    %s113 = scalar_lea.vmem %s0, 13
    %v114 = vld [vmem:[%s113] sm:$0x1]
    %115 = vrot.lane.b32.xlu0 %v114, 52
    %v116 = vpop.permute.xlu0 %115
    %vm117 = vcmask 458144
    %118 = vst.msk [vmem:[#allocation0] sm:$0x1] %vm117, %v116
    %s119 = scalar_lea.vmem %s0, 12
    %v120 = vld [vmem:[%s119] sm:$0x1]
    %121 = vrot.lane.b32.xlu0 %v120, 48
    %v122 = vpop.permute.xlu0 %121
    %vm123 = vcmask 425344
    %124 = vst.msk [vmem:[#allocation0] sm:$0x1] %vm123, %v122
    %s125 = scalar_lea.vmem %s0, 11
    %v126 = vld [vmem:[%s125] sm:$0x1]
    %127 = vrot.lane.b32.xlu0 %v126, 44
    %v128 = vpop.permute.xlu0 %127
    %vm129 = vcmask 392544
    %130 = vst.msk [vmem:[#allocation0] sm:$0x1] %vm129, %v128
    %s131 = scalar_lea.vmem %s0, 10
    %v132 = vld [vmem:[%s131] sm:$0x1]
    %133 = vrot.lane.b32.xlu0 %v132, 40
    %v134 = vpop.permute.xlu0 %133
    %vm135 = vcmask 359744
    %136 = vst.msk [vmem:[#allocation0] sm:$0x1] %vm135, %v134
    %s137 = scalar_lea.vmem %s0, 9
    %v138 = vld [vmem:[%s137] sm:$0x1]
    %139 = vrot.lane.b32.xlu0 %v138, 36
    %v140 = vpop.permute.xlu0 %139
    %vm141 = vcmask 326944
    %142 = vst.msk [vmem:[#allocation0] sm:$0x1] %vm141, %v140
    %s143 = scalar_lea.vmem %s0, 8
    %v144 = vld [vmem:[%s143] sm:$0x1]
    %145 = vrot.lane.b32.xlu0 %v144, 32
    %v146 = vpop.permute.xlu0 %145
    %vm147 = vcmask 294144
    %148 = vst.msk [vmem:[#allocation0] sm:$0x1] %vm147, %v146
    %s149 = scalar_lea.vmem %s0, 7
    %v150 = vld [vmem:[%s149] sm:$0x1]
    %151 = vrot.lane.b32.xlu0 %v150, 28
    %v152 = vpop.permute.xlu0 %151
    %vm153 = vcmask 261344
    %154 = vst.msk [vmem:[#allocation0] sm:$0x1] %vm153, %v152
    %s155 = scalar_lea.vmem %s0, 6
    %v156 = vld [vmem:[%s155] sm:$0x1]
    %157 = vrot.lane.b32.xlu0 %v156, 24
    %v158 = vpop.permute.xlu0 %157
    %vm159 = vcmask 228544
    %160 = vst.msk [vmem:[#allocation0] sm:$0x1] %vm159, %v158
    %s161 = scalar_lea.vmem %s0, 5
    %v162 = vld [vmem:[%s161] sm:$0x1]
    %163 = vrot.lane.b32.xlu0 %v162, 20
    %v164 = vpop.permute.xlu0 %163
    %vm165 = vcmask 195744
    %166 = vst.msk [vmem:[#allocation0] sm:$0x1] %vm165, %v164
    %s167 = scalar_lea.vmem %s0, 4
    %v168 = vld [vmem:[%s167] sm:$0x1]
    %169 = vrot.lane.b32.xlu0 %v168, 16
    %v170 = vpop.permute.xlu0 %169
    %vm171 = vcmask 162944
    %172 = vst.msk [vmem:[#allocation0] sm:$0x1] %vm171, %v170
    %s173 = scalar_lea.vmem %s0, 3
    %v174 = vld [vmem:[%s173] sm:$0x1]
    %175 = vrot.lane.b32.xlu0 %v174, 12
    %v176 = vpop.permute.xlu0 %175
    %vm177 = vcmask 130144
    %178 = vst.msk [vmem:[#allocation0] sm:$0x1] %vm177, %v176
    %s179 = scalar_lea.vmem %s0, 2
    %v180 = vld [vmem:[%s179] sm:$0x1]
    %181 = vrot.lane.b32.xlu0 %v180, 8
    %v182 = vpop.permute.xlu0 %181
    %vm183 = vcmask 97344
    %184 = vst.msk [vmem:[#allocation0] sm:$0x1] %vm183, %v182
    %s185 = scalar_lea.vmem %s0, 1
    %v186 = vld [vmem:[%s185] sm:$0x1]
    %187 = vrot.lane.b32.xlu0 %v186, 4
    %v188 = vpop.permute.xlu0 %187
    %vm189 = vcmask 64544
    %190 = vst.msk [vmem:[#allocation0] sm:$0x1] %vm189, %v188
    %s192 = ssub.s32 2, 1
    %v193 = vld [vmem:[#allocation0] sm:%s192]
    %s195 = ssub.s32 2, 1
    %196 = vst [vmem:[%s1] sm:%s195] %v193

// kernel: residual_block.1
$region0: #{residual_block.1}
  #allocation0 [shape = 'u32[]', space=smem, size = 0x4, offset = 0x4, fixed_abs, tag = 'smem constant byte address 0x4 - core index']
  #allocation1 [shape = 'u32[72,128]{1,0:T(1,128)}', space=vmem, size = 0x9000, scoped, tag = 'internal scratch']
  %s0 = inlined_call_operand.vmem [shape: f32[28,128], index: 0, kind: input, shape index: {}]
  %s1 = inlined_call_operand.vmem [shape: f32[128,384], index: 1, kind: input, shape index: {}]
  %s2 = inlined_call_operand.vmem [shape: f32[128,384], index: 2, kind: input, shape index: {}]
  %s3 = inlined_call_operand.vmem [shape: f32[128,128], index: 3, kind: input, shape index: {}]
  %s4 = inlined_call_operand.vmem [shape: f32[1,128], index: 4, kind: input, shape index: {}]
  %s5 = inlined_call_operand.vmem [shape: f32[1,128], index: 5, kind: input, shape index: {}]
  %s6 = inlined_call_operand.vmem [shape: f32[1,128], index: 6, kind: input, shape index: {}]
  %s7 = inlined_call_operand.vmem [shape: f32[1,128], index: 7, kind: input, shape index: {}]
  %s8 = inlined_call_operand.vmem [shape: f32[24,128], index: 8, kind: output, shape index: {}]
  %s9 = sld [smem:[#allocation0]]
  $region42: #{residual_block.1} parent=0
    _
  %s11 = ssub.s32 1, %s9
  %s12 = scalar_select 0, %s11, %s9
  // Predicated region
  $region2: #{residual_block.1} parent=0 // pred_check
    _
  $region3: #{residual_block.1} parent=0 // pred_check_branch
    %14 = sbr.rel (0) target = $region5
  $region4: #{residual_block.1} parent=0 // pred_region
    _
  $region5: #{residual_block.1} parent=0 // pred_fallthru
    _
  // Predicated region
  $region6: #{residual_block.1} parent=0 // pred_check
    _
  $region7: #{residual_block.1} parent=0 // pred_check_branch
    %16 = sbr.rel (0) target = $region9
  $region8: #{residual_block.1} parent=0 // pred_region
    _
  $region9: #{residual_block.1} parent=0 // pred_fallthru
    _
  // Predicated region
  $region10: #{residual_block.1} parent=0 // pred_check
    _
  $region11: #{residual_block.1} parent=0 // pred_check_branch
    %18 = sbr.rel (0) target = $region13
  $region12: #{residual_block.1} parent=0 // pred_region
    _
  $region13: #{residual_block.1} parent=0 // pred_fallthru
    _
  // Predicated region
  $region14: #{residual_block.1} parent=0 // pred_check
    _
  $region15: #{residual_block.1} parent=0 // pred_check_branch
    %20 = sbr.rel (0) target = $region17
  $region16: #{residual_block.1} parent=0 // pred_region
    _
  $region17: #{residual_block.1} parent=0 // pred_fallthru
    _
  // Predicated region
  $region18: #{residual_block.1} parent=0 // pred_check
    _
  $region19: #{residual_block.1} parent=0 // pred_check_branch
    %22 = sbr.rel (0) target = $region21
  $region20: #{residual_block.1} parent=0 // pred_region
    _
  $region21: #{residual_block.1} parent=0 // pred_fallthru
    _
  // Predicated region
  $region22: #{residual_block.1} parent=0 // pred_check
    _
  $region23: #{residual_block.1} parent=0 // pred_check_branch
    %24 = sbr.rel (0) target = $region25
  $region24: #{residual_block.1} parent=0 // pred_region
    _
  $region25: #{residual_block.1} parent=0 // pred_fallthru
    _
  // Predicated region
  $region26: #{residual_block.1} parent=0 // pred_check
    _
  $region27: #{residual_block.1} parent=0 // pred_check_branch
    %26 = sbr.rel (0) target = $region29
  $region28: #{residual_block.1} parent=0 // pred_region
    _
  $region29: #{residual_block.1} parent=0 // pred_fallthru
    _
  // Predicated region
  $region30: #{residual_block.1} parent=0 // pred_check
    _
  $region31: #{residual_block.1} parent=0 // pred_check_branch
    %28 = sbr.rel (0) target = $region33
  $region32: #{residual_block.1} parent=0 // pred_region
    _
  $region33: #{residual_block.1} parent=0 // pred_fallthru
    _
  %v29 = vlaneseq
  %v30 = vshrl.u32 %v29, 7
  %v31 = vadd.s32 %v30, 8
  %v32 = vadd.s32 %v30, 16
  %v33 = vadd.s32 %v30, 24
  %v34 = vadd.s32 %v30, 1
  %v35 = vadd.s32 %v31, 1
  %v36 = vadd.s32 %v32, 1
  %v37 = vadd.s32 %v33, 1
  %v38 = vlaneseq
  %v39 = vand.u32 %v38, 127
  %vm40 = vcmp.ge.s32.totalorder %v39, 64
  %vm41 = vcmp.ge.s32.totalorder %v34, 2
  %vm42 = vcmp.ge.s32.totalorder %v35, 2
  %vm43 = vcmp.ge.s32.totalorder %v36, 2
  %vm44 = vcmp.ge.s32.totalorder %v37, 2
  %vm45 = vcmp.lt.s32.totalorder %v34, 20
  %vm46 = vcmp.lt.s32.totalorder %v35, 20
  %vm47 = vcmp.lt.s32.totalorder %v36, 20
  %vm48 = vcmp.lt.s32.totalorder %v37, 20
  %vm49 = vmand %vm41, %vm45
  %vm50 = vmand %vm42, %vm46
  %vm51 = vmand %vm43, %vm47
  %vm52 = vmand %vm44, %vm48
  %vm53 = vcmp.eq.s32.totalorder %v34, 2
  %vm54 = vcmp.eq.s32.totalorder %v35, 2
  %vm55 = vcmp.eq.s32.totalorder %v36, 2
  %vm56 = vcmp.eq.s32.totalorder %v37, 2
  %vm57 = vmxor %vm40, 1
  %vm58 = vmand %vm53, %vm57
  %vm59 = vmand %vm54, %vm57
  %vm60 = vmand %vm55, %vm57
  %vm61 = vmand %vm56, %vm57
  %vm62 = vmxor %vm58, 1
  %vm63 = vmxor %vm59, 1
  %vm64 = vmxor %vm60, 1
  %vm65 = vmxor %vm61, 1
  %vm66 = vmand %vm49, %vm62
  %vm67 = vmand %vm50, %vm63
  %vm68 = vmand %vm51, %vm64
  %vm69 = vmand %vm52, %vm65
  %vm70 = vcmp.eq.s32.totalorder %v34, 10
  %vm71 = vcmp.eq.s32.totalorder %v35, 10
  %vm72 = vcmp.eq.s32.totalorder %v36, 10
  %vm73 = vcmp.eq.s32.totalorder %v37, 10
  %vm74 = vmand %vm70, %vm40
  %vm75 = vmand %vm71, %vm40
  %vm76 = vmand %vm72, %vm40
  %vm77 = vmand %vm73, %vm40
  %vm78 = vmxor %vm74, 1
  %vm79 = vmxor %vm75, 1
  %vm80 = vmxor %vm76, 1
  %vm81 = vmxor %vm77, 1
  %vm82 = vmand %vm66, %vm78
  %vm83 = vmand %vm67, %vm79
  %vm84 = vmand %vm68, %vm80
  %vm85 = vmand %vm69, %vm81
  %vm86 = vcmp.eq.s32.totalorder %v34, 11
  %vm87 = vcmp.eq.s32.totalorder %v35, 11
  %vm88 = vcmp.eq.s32.totalorder %v36, 11
  %vm89 = vcmp.eq.s32.totalorder %v37, 11
  %vm90 = vmand %vm86, %vm57
  %vm91 = vmand %vm87, %vm57
  %vm92 = vmand %vm88, %vm57
  %vm93 = vmand %vm89, %vm57
  %vm94 = vmxor %vm90, 1
  %vm95 = vmxor %vm91, 1
  %vm96 = vmxor %vm92, 1
  %vm97 = vmxor %vm93, 1
  %vm98 = vmand %vm82, %vm94
  %vm99 = vmand %vm83, %vm95
  %vm100 = vmand %vm84, %vm96
  %vm101 = vmand %vm85, %vm97
  %vm102 = vcmp.eq.s32.totalorder %v34, 19
  %vm103 = vcmp.eq.s32.totalorder %v35, 19
  %vm104 = vcmp.eq.s32.totalorder %v36, 19
  %vm105 = vcmp.eq.s32.totalorder %v37, 19
  %vm106 = vmand %vm102, %vm40
  %vm107 = vmand %vm103, %vm40
  %vm108 = vmand %vm104, %vm40
  %vm109 = vmand %vm105, %vm40
  %vm110 = vmxor %vm106, 1
  %vm111 = vmxor %vm107, 1
  %vm112 = vmxor %vm108, 1
  %vm113 = vmxor %vm109, 1
  %vm114 = vmand %vm98, %vm110
  %vm115 = vmand %vm99, %vm111
  %vm116 = vmand %vm100, %vm112
  %vm117 = vmand %vm101, %vm113
  %v118 = vsel %vm114, 1, 0
  %v119 = vsel %vm115, 1, 0
  %v120 = vsel %vm116, 1, 0
  %v121 = vsel %vm117, 1, 0
  %v122 = vcvt.s32.f32 %v118
  %v123 = vcvt.s32.f32 %v119
  %v124 = vcvt.s32.f32 %v120
  %v125 = vcvt.s32.f32 %v121
  %v126 = vld [vmem:[%s0] sm:$0xff]
  %v127 = vld [vmem:[%s0 + $0x8] sm:$0xff]
  %v128 = vld [vmem:[%s0 + $0x10] sm:$0xff]
  %v129 = vld [vmem:[%s0 + $0x18] sm:$0xf]
  %v130 = vld [vmem:[%s1] sm:$0xff]
  %v131 = vld [vmem:[%s1 + $0x8] sm:$0xff]
  %v132 = vld [vmem:[%s1 + $0x10] sm:$0xff]
  %v133 = vld [vmem:[%s1 + $0x18] sm:$0xff]
  %v134 = vld [vmem:[%s1 + $0x20] sm:$0xff]
  %v135 = vld [vmem:[%s1 + $0x28] sm:$0xff]
  %v136 = vld [vmem:[%s1 + $0x30] sm:$0xff]
  %v137 = vld [vmem:[%s1 + $0x38] sm:$0xff]
  %v138 = vld [vmem:[%s1 + $0x40] sm:$0xff]
  %v139 = vld [vmem:[%s1 + $0x48] sm:$0xff]
  %v140 = vld [vmem:[%s1 + $0x50] sm:$0xff]
  %v141 = vld [vmem:[%s1 + $0x58] sm:$0xff]
  %v142 = vld [vmem:[%s1 + $0x60] sm:$0xff]
  %v143 = vld [vmem:[%s1 + $0x68] sm:$0xff]
  %v144 = vld [vmem:[%s1 + $0x70] sm:$0xff]
  %v145 = vld [vmem:[%s1 + $0x78] sm:$0xff]
  %v146 = vld [vmem:[%s1 + $0x80] sm:$0xff]
  %v147 = vld [vmem:[%s1 + $0x88] sm:$0xff]
  %v148 = vld [vmem:[%s1 + $0x90] sm:$0xff]
  %v149 = vld [vmem:[%s1 + $0x98] sm:$0xff]
  %v150 = vld [vmem:[%s1 + $0xa0] sm:$0xff]
  %v151 = vld [vmem:[%s1 + $0xa8] sm:$0xff]
  %v152 = vld [vmem:[%s1 + $0xb0] sm:$0xff]
  %v153 = vld [vmem:[%s1 + $0xb8] sm:$0xff]
  %v154 = vld [vmem:[%s1 + $0xc0] sm:$0xff]
  %v155 = vld [vmem:[%s1 + $0xc8] sm:$0xff]
  %v156 = vld [vmem:[%s1 + $0xd0] sm:$0xff]
  %v157 = vld [vmem:[%s1 + $0xd8] sm:$0xff]
  %v158 = vld [vmem:[%s1 + $0xe0] sm:$0xff]
  %v159 = vld [vmem:[%s1 + $0xe8] sm:$0xff]
  %v160 = vld [vmem:[%s1 + $0xf0] sm:$0xff]
  %v161 = vld [vmem:[%s1 + $0xf8] sm:$0xff]
  %v162 = vld [vmem:[%s1 + $0x100] sm:$0xff]
  %v163 = vld [vmem:[%s1 + $0x108] sm:$0xff]
  %v164 = vld [vmem:[%s1 + $0x110] sm:$0xff]
  %v165 = vld [vmem:[%s1 + $0x118] sm:$0xff]
  %v166 = vld [vmem:[%s1 + $0x120] sm:$0xff]
  %v167 = vld [vmem:[%s1 + $0x128] sm:$0xff]
  %v168 = vld [vmem:[%s1 + $0x130] sm:$0xff]
  %v169 = vld [vmem:[%s1 + $0x138] sm:$0xff]
  %v170 = vld [vmem:[%s1 + $0x140] sm:$0xff]
  %v171 = vld [vmem:[%s1 + $0x148] sm:$0xff]
  %v172 = vld [vmem:[%s1 + $0x150] sm:$0xff]
  %v173 = vld [vmem:[%s1 + $0x158] sm:$0xff]
  %v174 = vld [vmem:[%s1 + $0x160] sm:$0xff]
  %v175 = vld [vmem:[%s1 + $0x168] sm:$0xff]
  %v176 = vld [vmem:[%s1 + $0x170] sm:$0xff]
  %v177 = vld [vmem:[%s1 + $0x178] sm:$0xff]
  %178 = vmatpush.msra.mxu0 %v175
  %179 = vmatpush.msra.mxu0 %v172
  %180 = vmatpush.msra.mxu0 %v169
  %181 = vmatpush.msra.mxu0 %v166
  %182 = vmatpush.msra.mxu0 %v163
  %183 = vmatpush.msra.mxu0 %v160
  %184 = vmatpush.msra.mxu0 %v157
  %185 = vmatpush.msra.mxu0 %v154
  %186 = vmatpush.msra.mxu0 %v151
  %187 = vmatpush.msra.mxu0 %v148
  %188 = vmatpush.msra.mxu0 %v145
  %189 = vmatpush.msra.mxu0 %v142
  %190 = vmatpush.msra.mxu0 %v139
  %191 = vmatpush.msra.mxu0 %v136
  %192 = vmatpush.msra.mxu0 %v133
  %193 = vmatpush.msra.mxu0 %v130
  %194 = vmatmul.f32.gmra.mxu0 %v126
  %v195 = vpop.f32.mrf.mxu0
  %v196 = vadd.f32 0.0, %v195
  %197 = vmatmul.f32.gmra.mxu0 %v127
  %v198 = vpop.f32.mrf.mxu0
  %v199 = vadd.f32 0.0, %v198
  %200 = vmatmul.f32.gmra.mxu0 %v128
  %v201 = vpop.f32.mrf.mxu0
  %v202 = vadd.f32 0.0, %v201
  %203 = vmatmul.f32.gmra.mxu0 %v129
  %v204 = vpop.f32.mrf.mxu0
  %v205 = vadd.f32 0.0, %v204
  %206 = vdwg.mxu0
  %207 = vmatpush.msra.mxu0 %v176
  %208 = vmatpush.msra.mxu0 %v173
  %209 = vmatpush.msra.mxu0 %v170
  %210 = vmatpush.msra.mxu0 %v167
  %211 = vmatpush.msra.mxu0 %v164
  %212 = vmatpush.msra.mxu0 %v161
  %213 = vmatpush.msra.mxu0 %v158
  %214 = vmatpush.msra.mxu0 %v155
  %215 = vmatpush.msra.mxu0 %v152
  %216 = vmatpush.msra.mxu0 %v149
  %217 = vmatpush.msra.mxu0 %v146
  %218 = vmatpush.msra.mxu0 %v143
  %219 = vmatpush.msra.mxu0 %v140
  %220 = vmatpush.msra.mxu0 %v137
  %221 = vmatpush.msra.mxu0 %v134
  %222 = vmatpush.msra.mxu0 %v131
  %223 = vmatmul.f32.gmra.mxu0 %v126
  %v224 = vpop.f32.mrf.mxu0
  %v225 = vadd.f32 0.0, %v224
  %226 = vmatmul.f32.gmra.mxu0 %v127
  %v227 = vpop.f32.mrf.mxu0
  %v228 = vadd.f32 0.0, %v227
  %229 = vmatmul.f32.gmra.mxu0 %v128
  %v230 = vpop.f32.mrf.mxu0
  %v231 = vadd.f32 0.0, %v230
  %232 = vmatmul.f32.gmra.mxu0 %v129
  %v233 = vpop.f32.mrf.mxu0
  %v234 = vadd.f32 0.0, %v233
  %235 = vdwg.mxu0
  %236 = vmatpush.msra.mxu0 %v177
  %237 = vmatpush.msra.mxu0 %v174
  %238 = vmatpush.msra.mxu0 %v171
  %239 = vmatpush.msra.mxu0 %v168
  %240 = vmatpush.msra.mxu0 %v165
  %241 = vmatpush.msra.mxu0 %v162
  %242 = vmatpush.msra.mxu0 %v159
  %243 = vmatpush.msra.mxu0 %v156
  %244 = vmatpush.msra.mxu0 %v153
  %245 = vmatpush.msra.mxu0 %v150
  %246 = vmatpush.msra.mxu0 %v147
  %247 = vmatpush.msra.mxu0 %v144
  %248 = vmatpush.msra.mxu0 %v141
  %249 = vmatpush.msra.mxu0 %v138
  %250 = vmatpush.msra.mxu0 %v135
  %251 = vmatpush.msra.mxu0 %v132
  %252 = vmatmul.f32.gmra.mxu0 %v126
  %v253 = vpop.f32.mrf.mxu0
  %v254 = vadd.f32 0.0, %v253
  %255 = vmatmul.f32.gmra.mxu0 %v127
  %v256 = vpop.f32.mrf.mxu0
  %v257 = vadd.f32 0.0, %v256
  %258 = vmatmul.f32.gmra.mxu0 %v128
  %v259 = vpop.f32.mrf.mxu0
  %v260 = vadd.f32 0.0, %v259
  %261 = vmatmul.f32.gmra.mxu0 %v129
  %v262 = vpop.f32.mrf.mxu0
  %v263 = vadd.f32 0.0, %v262
  %264 = vdwg.mxu0
  %vm269 = vcmask 1046528
  %v270 = vrot.slane %v225, 1
  %v271 = vrot.slane %v228, 1
  %v272 = vsel %vm269, %v270, %v271
  %v273 = vrot.slane %v231, 1
  %v274 = vsel %vm269, %v271, %v273
  %v275 = vrot.slane %v234, 1
  %v276 = vsel %vm269, %v273, %v275
  %v281 = vadd.f32 %v196, %v272
  %v282 = vadd.f32 %v199, %v274
  %v283 = vadd.f32 %v202, %v276
  %v284 = vadd.f32 %v205, %v275
  %vm289 = vcmask 1045504
  %v290 = vrot.slane %v254, 2
  %v291 = vrot.slane %v257, 2
  %v292 = vsel %vm289, %v290, %v291
  %v293 = vrot.slane %v260, 2
  %v294 = vsel %vm289, %v291, %v293
  %v295 = vrot.slane %v263, 2
  %v296 = vsel %vm289, %v293, %v295
  %v301 = vadd.f32 %v281, %v292
  %v302 = vadd.f32 %v282, %v294
  %v303 = vadd.f32 %v283, %v296
  %v304 = vadd.f32 %v284, %v295
  %v305 = vmul.f32 %v301, %v122
  %v306 = vmul.f32 %v302, %v123
  %v307 = vmul.f32 %v303, %v124
  %v308 = vmul.f32 %v304, %v125
  %v309 = vld [vmem:[%s4] sm:$0x1]
  %v310 = vld [vmem:[%s5] sm:$0x1]
  %v311 = vadd.f32 %v305, %v306
  %v312 = vadd.f32 %v311, %v307
  %vm313 = vcmask 1041408
  %v314 = vsel %vm313, %v308, 0.0
  %v315 = vadd.f32 %v312, %v314
  %v316 = vrot.slane %v315, 4
  %v317 = vadd.f32 %v315, %v316
  %v318 = vrot.slane %v317, 2
  %v319 = vadd.f32 %v317, %v318
  %v320 = vrot.slane %v319, 1
  %v321 = vadd.f32 %v319, %v320
  %v322 = vmul.f32 %v305, %v305
  %v323 = vmul.f32 %v306, %v306
  %v324 = vmul.f32 %v307, %v307
  %v325 = vmul.f32 %v308, %v308
  %v326 = vadd.f32 %v322, %v323
  %v327 = vadd.f32 %v326, %v324
  %v328 = vsel %vm313, %v325, 0.0
  %v329 = vadd.f32 %v327, %v328
  %v330 = vrot.slane %v329, 4
  %v331 = vadd.f32 %v329, %v330
  %v332 = vrot.slane %v331, 2
  %v333 = vadd.f32 %v331, %v332
  %v334 = vrot.slane %v333, 1
  %v335 = vadd.f32 %v333, %v334
  %vm336 = vcmask 1040384
  %v337 = vsel %vm336, %v321, %v335
  %v338 = vld [vmem:[%s3] sm:$0xff]
  %v339 = vld [vmem:[%s3 + $0x8] sm:$0xff]
  %v340 = vld [vmem:[%s3 + $0x10] sm:$0xff]
  %v341 = vld [vmem:[%s3 + $0x18] sm:$0xff]
  %v342 = vld [vmem:[%s3 + $0x20] sm:$0xff]
  %v343 = vld [vmem:[%s3 + $0x28] sm:$0xff]
  %v344 = vld [vmem:[%s3 + $0x30] sm:$0xff]
  %v345 = vld [vmem:[%s3 + $0x38] sm:$0xff]
  %v346 = vld [vmem:[%s3 + $0x40] sm:$0xff]
  %v347 = vld [vmem:[%s3 + $0x48] sm:$0xff]
  %v348 = vld [vmem:[%s3 + $0x50] sm:$0xff]
  %v349 = vld [vmem:[%s3 + $0x58] sm:$0xff]
  %v350 = vld [vmem:[%s3 + $0x60] sm:$0xff]
  %v351 = vld [vmem:[%s3 + $0x68] sm:$0xff]
  %v352 = vld [vmem:[%s3 + $0x70] sm:$0xff]
  %v353 = vld [vmem:[%s3 + $0x78] sm:$0xff]
  %354 = vmatpush.msra.mxu0 %v353
  %355 = vmatpush.msra.mxu0 %v352
  %356 = vmatpush.msra.mxu0 %v351
  %357 = vmatpush.msra.mxu0 %v350
  %358 = vmatpush.msra.mxu0 %v349
  %359 = vmatpush.msra.mxu0 %v348
  %360 = vmatpush.msra.mxu0 %v347
  %361 = vmatpush.msra.mxu0 %v346
  %362 = vmatpush.msra.mxu0 %v345
  %363 = vmatpush.msra.mxu0 %v344
  %364 = vmatpush.msra.mxu0 %v343
  %365 = vmatpush.msra.mxu0 %v342
  %366 = vmatpush.msra.mxu0 %v341
  %367 = vmatpush.msra.mxu0 %v340
  %368 = vmatpush.msra.mxu0 %v339
  %369 = vmatpush.msra.mxu0 %v338
  %370 = vmatmul.f32.gmra.mxu0 %v337
  %v371 = vpop.f32.mrf.mxu0
  %v372 = vadd.f32 0.0, %v371
  %373 = vdwg.mxu0
  %v374 = vmul.f32 %v372, %v372
  %v376 = vrot.slane %v374, 7
  %v378 = vsub.f32 %v372, %v376
  %v379 = vadd.f32 %v378, 1e-05
  %v380 = vrsqrt.pop %v379
  %v381 = vmul.f32 %v380, %v379
  %v382 = vmul.f32 %v381, %v380
  %v383 = vmul.f32 0.5, %v382
  %v384 = vsub.f32 1.5, %v383
  %v385 = vmul.f32 %v380, %v384
  %vm386 = vweird.f32 %v379
  %vm387 = vweird.f32 %v380
  %vm388 = vmor %vm386, %vm387
  %v389 = vsel %vm388, %v380, %v385
  %v390 = vperm.slane %v372, 0
  %v391 = vsub.f32 %v305, %v390
  %v392 = vsub.f32 %v306, %v390
  %v393 = vsub.f32 %v307, %v390
  %v394 = vsub.f32 %v308, %v390
  %v396 = vperm.slane %v309, 0
  %v398 = vmul.f32 %v389, %v396
  %v399 = vperm.slane %v398, 1
  %v400 = vmul.f32 %v391, %v399
  %v401 = vmul.f32 %v392, %v399
  %v402 = vmul.f32 %v393, %v399
  %v403 = vmul.f32 %v394, %v399
  %v405 = vperm.slane %v310, 0
  %v407 = vadd.f32 %v400, %v405
  %v408 = vadd.f32 %v401, %v405
  %v409 = vadd.f32 %v402, %v405
  %v410 = vadd.f32 %v403, %v405
  %v411 = vmax.f32 %v407, 0.0
  %v412 = vmax.f32 %v408, 0.0
  %v413 = vmax.f32 %v409, 0.0
  %v414 = vmax.f32 %v410, 0.0
  %v415 = vmul.f32 %v411, %v122
  %v416 = vmul.f32 %v412, %v123
  %v417 = vmul.f32 %v413, %v124
  %v418 = vmul.f32 %v414, %v125
  %v419 = vld [vmem:[%s2] sm:$0xff]
  %v420 = vld [vmem:[%s2 + $0x8] sm:$0xff]
  %v421 = vld [vmem:[%s2 + $0x10] sm:$0xff]
  %v422 = vld [vmem:[%s2 + $0x18] sm:$0xff]
  %v423 = vld [vmem:[%s2 + $0x20] sm:$0xff]
  %v424 = vld [vmem:[%s2 + $0x28] sm:$0xff]
  %v425 = vld [vmem:[%s2 + $0x30] sm:$0xff]
  %v426 = vld [vmem:[%s2 + $0x38] sm:$0xff]
  %v427 = vld [vmem:[%s2 + $0x40] sm:$0xff]
  %v428 = vld [vmem:[%s2 + $0x48] sm:$0xff]
  %v429 = vld [vmem:[%s2 + $0x50] sm:$0xff]
  %v430 = vld [vmem:[%s2 + $0x58] sm:$0xff]
  %v431 = vld [vmem:[%s2 + $0x60] sm:$0xff]
  %v432 = vld [vmem:[%s2 + $0x68] sm:$0xff]
  %v433 = vld [vmem:[%s2 + $0x70] sm:$0xff]
  %v434 = vld [vmem:[%s2 + $0x78] sm:$0xff]
  %v435 = vld [vmem:[%s2 + $0x80] sm:$0xff]
  %v436 = vld [vmem:[%s2 + $0x88] sm:$0xff]
  %v437 = vld [vmem:[%s2 + $0x90] sm:$0xff]
  %v438 = vld [vmem:[%s2 + $0x98] sm:$0xff]
  %v439 = vld [vmem:[%s2 + $0xa0] sm:$0xff]
  %v440 = vld [vmem:[%s2 + $0xa8] sm:$0xff]
  %v441 = vld [vmem:[%s2 + $0xb0] sm:$0xff]
  %v442 = vld [vmem:[%s2 + $0xb8] sm:$0xff]
  %v443 = vld [vmem:[%s2 + $0xc0] sm:$0xff]
  %v444 = vld [vmem:[%s2 + $0xc8] sm:$0xff]
  %v445 = vld [vmem:[%s2 + $0xd0] sm:$0xff]
  %v446 = vld [vmem:[%s2 + $0xd8] sm:$0xff]
  %v447 = vld [vmem:[%s2 + $0xe0] sm:$0xff]
  %v448 = vld [vmem:[%s2 + $0xe8] sm:$0xff]
  %v449 = vld [vmem:[%s2 + $0xf0] sm:$0xff]
  %v450 = vld [vmem:[%s2 + $0xf8] sm:$0xff]
  %v451 = vld [vmem:[%s2 + $0x100] sm:$0xff]
  %v452 = vld [vmem:[%s2 + $0x108] sm:$0xff]
  %v453 = vld [vmem:[%s2 + $0x110] sm:$0xff]
  %v454 = vld [vmem:[%s2 + $0x118] sm:$0xff]
  %v455 = vld [vmem:[%s2 + $0x120] sm:$0xff]
  %v456 = vld [vmem:[%s2 + $0x128] sm:$0xff]
  %v457 = vld [vmem:[%s2 + $0x130] sm:$0xff]
  %v458 = vld [vmem:[%s2 + $0x138] sm:$0xff]
  %v459 = vld [vmem:[%s2 + $0x140] sm:$0xff]
  %v460 = vld [vmem:[%s2 + $0x148] sm:$0xff]
  %v461 = vld [vmem:[%s2 + $0x150] sm:$0xff]
  %v462 = vld [vmem:[%s2 + $0x158] sm:$0xff]
  %v463 = vld [vmem:[%s2 + $0x160] sm:$0xff]
  %v464 = vld [vmem:[%s2 + $0x168] sm:$0xff]
  %v465 = vld [vmem:[%s2 + $0x170] sm:$0xff]
  %v466 = vld [vmem:[%s2 + $0x178] sm:$0xff]
  %467 = vmatpush.msra.mxu0 %v464
  %468 = vmatpush.msra.mxu0 %v461
  %469 = vmatpush.msra.mxu0 %v458
  %470 = vmatpush.msra.mxu0 %v455
  %471 = vmatpush.msra.mxu0 %v452
  %472 = vmatpush.msra.mxu0 %v449
  %473 = vmatpush.msra.mxu0 %v446
  %474 = vmatpush.msra.mxu0 %v443
  %475 = vmatpush.msra.mxu0 %v440
  %476 = vmatpush.msra.mxu0 %v437
  %477 = vmatpush.msra.mxu0 %v434
  %478 = vmatpush.msra.mxu0 %v431
  %479 = vmatpush.msra.mxu0 %v428
  %480 = vmatpush.msra.mxu0 %v425
  %481 = vmatpush.msra.mxu0 %v422
  %482 = vmatpush.msra.mxu0 %v419
  %483 = vmatmul.f32.gmra.mxu0 %v415
  %v484 = vpop.f32.mrf.mxu0
  %v485 = vadd.f32 0.0, %v484
  %486 = vmatmul.f32.gmra.mxu0 %v416
  %v487 = vpop.f32.mrf.mxu0
  %v488 = vadd.f32 0.0, %v487
  %489 = vmatmul.f32.gmra.mxu0 %v417
  %v490 = vpop.f32.mrf.mxu0
  %v491 = vadd.f32 0.0, %v490
  %492 = vmatmul.f32.gmra.mxu0 %v418
  %v493 = vpop.f32.mrf.mxu0
  %494 = vdwg.mxu0
  %495 = vmatpush.msra.mxu0 %v465
  %496 = vmatpush.msra.mxu0 %v462
  %497 = vmatpush.msra.mxu0 %v459
  %498 = vmatpush.msra.mxu0 %v456
  %499 = vmatpush.msra.mxu0 %v453
  %500 = vmatpush.msra.mxu0 %v450
  %501 = vmatpush.msra.mxu0 %v447
  %502 = vmatpush.msra.mxu0 %v444
  %503 = vmatpush.msra.mxu0 %v441
  %504 = vmatpush.msra.mxu0 %v438
  %505 = vmatpush.msra.mxu0 %v435
  %506 = vmatpush.msra.mxu0 %v432
  %507 = vmatpush.msra.mxu0 %v429
  %508 = vmatpush.msra.mxu0 %v426
  %509 = vmatpush.msra.mxu0 %v423
  %510 = vmatpush.msra.mxu0 %v420
  %511 = vmatmul.f32.gmra.mxu0 %v415
  %v512 = vpop.f32.mrf.mxu0
  %v513 = vadd.f32 0.0, %v512
  %514 = vmatmul.f32.gmra.mxu0 %v416
  %v515 = vpop.f32.mrf.mxu0
  %v516 = vadd.f32 0.0, %v515
  %517 = vmatmul.f32.gmra.mxu0 %v417
  %v518 = vpop.f32.mrf.mxu0
  %v519 = vadd.f32 0.0, %v518
  %520 = vmatmul.f32.gmra.mxu0 %v418
  %v521 = vpop.f32.mrf.mxu0
  %v522 = vadd.f32 0.0, %v521
  %523 = vdwg.mxu0
  %524 = vmatpush.msra.mxu0 %v466
  %525 = vmatpush.msra.mxu0 %v463
  %526 = vmatpush.msra.mxu0 %v460
  %527 = vmatpush.msra.mxu0 %v457
  %528 = vmatpush.msra.mxu0 %v454
  %529 = vmatpush.msra.mxu0 %v451
  %530 = vmatpush.msra.mxu0 %v448
  %531 = vmatpush.msra.mxu0 %v445
  %532 = vmatpush.msra.mxu0 %v442
  %533 = vmatpush.msra.mxu0 %v439
  %534 = vmatpush.msra.mxu0 %v436
  %535 = vmatpush.msra.mxu0 %v433
  %536 = vmatpush.msra.mxu0 %v430
  %537 = vmatpush.msra.mxu0 %v427
  %538 = vmatpush.msra.mxu0 %v424
  %539 = vmatpush.msra.mxu0 %v421
  %540 = vmatmul.f32.gmra.mxu0 %v415
  %v541 = vpop.f32.mrf.mxu0
  %v542 = vadd.f32 0.0, %v541
  %543 = vmatmul.f32.gmra.mxu0 %v416
  %v544 = vpop.f32.mrf.mxu0
  %v545 = vadd.f32 0.0, %v544
  %546 = vmatmul.f32.gmra.mxu0 %v417
  %v547 = vpop.f32.mrf.mxu0
  %v548 = vadd.f32 0.0, %v547
  %549 = vmatmul.f32.gmra.mxu0 %v418
  %v550 = vpop.f32.mrf.mxu0
  %v551 = vadd.f32 0.0, %v550
  %552 = vdwg.mxu0
  %v557 = vrot.slane %v513, 1
  %v558 = vrot.slane %v516, 1
  %v559 = vsel %vm269, %v557, %v558
  %v560 = vrot.slane %v519, 1
  %v561 = vsel %vm269, %v558, %v560
  %v562 = vrot.slane %v522, 1
  %v563 = vsel %vm269, %v560, %v562
  %v567 = vadd.f32 %v485, %v559
  %v568 = vadd.f32 %v488, %v561
  %v569 = vadd.f32 %v491, %v563
  %v574 = vrot.slane %v542, 2
  %v575 = vrot.slane %v545, 2
  %v576 = vsel %vm289, %v574, %v575
  %v577 = vrot.slane %v548, 2
  %v578 = vsel %vm289, %v575, %v577
  %v579 = vrot.slane %v551, 2
  %v580 = vsel %vm289, %v577, %v579
  %v584 = vadd.f32 %v567, %v576
  %v585 = vadd.f32 %v568, %v578
  %v586 = vadd.f32 %v569, %v580
  %v591 = vrot.slane %v122, 1
  %v592 = vrot.slane %v123, 1
  %v593 = vsel %vm269, %v591, %v592
  %v594 = vrot.slane %v124, 1
  %v595 = vsel %vm269, %v592, %v594
  %v596 = vrot.slane %v125, 1
  %v597 = vsel %vm269, %v594, %v596
  %v601 = vmul.f32 %v584, %v593
  %v602 = vmul.f32 %v585, %v595
  %v603 = vmul.f32 %v586, %v597
  %v604 = vld [vmem:[%s6] sm:$0x1]
  %v605 = vld [vmem:[%s7] sm:$0x1]
  %v606 = vadd.f32 %v601, %v602
  %v607 = vadd.f32 %v606, %v603
  %v608 = vrot.slane %v607, 4
  %v609 = vadd.f32 %v607, %v608
  %v610 = vrot.slane %v609, 2
  %v611 = vadd.f32 %v609, %v610
  %v612 = vrot.slane %v611, 1
  %v613 = vadd.f32 %v611, %v612
  %v614 = vmul.f32 %v601, %v601
  %v615 = vmul.f32 %v602, %v602
  %v616 = vmul.f32 %v603, %v603
  %v617 = vadd.f32 %v614, %v615
  %v618 = vadd.f32 %v617, %v616
  %v619 = vrot.slane %v618, 4
  %v620 = vadd.f32 %v618, %v619
  %v621 = vrot.slane %v620, 2
  %v622 = vadd.f32 %v620, %v621
  %v623 = vrot.slane %v622, 1
  %v624 = vadd.f32 %v622, %v623
  %v625 = vsel %vm336, %v613, %v624
  %626 = vmatpush.msra.mxu0 %v353
  %627 = vmatpush.msra.mxu0 %v352
  %628 = vmatpush.msra.mxu0 %v351
  %629 = vmatpush.msra.mxu0 %v350
  %630 = vmatpush.msra.mxu0 %v349
  %631 = vmatpush.msra.mxu0 %v348
  %632 = vmatpush.msra.mxu0 %v347
  %633 = vmatpush.msra.mxu0 %v346
  %634 = vmatpush.msra.mxu0 %v345
  %635 = vmatpush.msra.mxu0 %v344
  %636 = vmatpush.msra.mxu0 %v343
  %637 = vmatpush.msra.mxu0 %v342
  %638 = vmatpush.msra.mxu0 %v341
  %639 = vmatpush.msra.mxu0 %v340
  %640 = vmatpush.msra.mxu0 %v339
  %641 = vmatpush.msra.mxu0 %v338
  %642 = vmatmul.f32.gmra.mxu0 %v625
  %v643 = vpop.f32.mrf.mxu0
  %v644 = vadd.f32 0.0, %v643
  %645 = vdwg.mxu0
  %v646 = vmul.f32 %v644, %v644
  %v648 = vrot.slane %v646, 7
  %v650 = vsub.f32 %v644, %v648
  %v651 = vadd.f32 %v650, 1e-05
  %v652 = vrsqrt.pop %v651
  %v653 = vmul.f32 %v652, %v651
  %v654 = vmul.f32 %v653, %v652
  %v655 = vmul.f32 0.5, %v654
  %v656 = vsub.f32 1.5, %v655
  %v657 = vmul.f32 %v652, %v656
  %vm658 = vweird.f32 %v651
  %vm659 = vweird.f32 %v652
  %vm660 = vmor %vm658, %vm659
  %v661 = vsel %vm660, %v652, %v657
  %v662 = vperm.slane %v644, 0
  %v663 = vsub.f32 %v601, %v662
  %v664 = vsub.f32 %v602, %v662
  %v665 = vsub.f32 %v603, %v662
  %v667 = vperm.slane %v604, 0
  %v669 = vmul.f32 %v661, %v667
  %v670 = vperm.slane %v669, 1
  %v671 = vmul.f32 %v663, %v670
  %v672 = vmul.f32 %v664, %v670
  %v673 = vmul.f32 %v665, %v670
  %v675 = vperm.slane %v605, 0
  %v677 = vadd.f32 %v671, %v675
  %v678 = vadd.f32 %v672, %v675
  %v679 = vadd.f32 %v673, %v675
  %v684 = vrot.slane %v126, 2
  %v685 = vrot.slane %v127, 2
  %v686 = vsel %vm289, %v684, %v685
  %v687 = vrot.slane %v128, 2
  %v688 = vsel %vm289, %v685, %v687
  %v689 = vrot.slane %v129, 2
  %v690 = vsel %vm289, %v687, %v689
  %v694 = vadd.f32 %v677, %v686
  %v695 = vadd.f32 %v678, %v688
  %v696 = vadd.f32 %v679, %v690
  %697 = vst [vmem:[%s8] sm:$0xff] %v694
  %698 = vst [vmem:[%s8 + $0x8] sm:$0xff] %v695
  %699 = vst [vmem:[%s8 + $0x10] sm:$0xff] %v696
  // Predicated region
  $region34: #{residual_block.1} parent=0 // pred_check
    _
  $region35: #{residual_block.1} parent=0 // pred_check_branch
    %701 = sbr.rel (0) target = $region37
  $region36: #{residual_block.1} parent=0 // pred_region
    _
  $region37: #{residual_block.1} parent=0 // pred_fallthru
    _
  // Predicated region
  $region38: #{residual_block.1} parent=0 // pred_check
    _
  $region39: #{residual_block.1} parent=0 // pred_check_branch
    %703 = sbr.rel (0) target = $region41
  $region40: #{residual_block.1} parent=0 // pred_region
    _
  $region41: #{residual_block.1} parent=0 // pred_fallthru
    _

</llo_original>
